<compile_context>
chip_gen: v7x
topology: tpu7x:2x2x1
jax: 0.10.0
libtpu: 0.0.40
codegen_flags: <defaults>
</compile_context>

<pallas_src>
import functools

import jax
import jax.numpy as jnp
from jax.experimental import pallas as pl
from jax.experimental.pallas import tpu as pltpu


def _round_up(n, m):
    return ((n + m - 1) // m) * m


def _mlp_kernel(p_ref, x_ref, o_ref, *, dims):
    """p_ref: SMEM (P,) packed [w1,b1,...,w5,b5] (w row-major (in,out)).
    x_ref: VMEM (in_features, TB)  — batch on lanes.
    o_ref: VMEM (out_features, TB) — batch on lanes.
    """
    n_layers = len(dims)
    d_in = dims[0][0]

    # Activations carried as a list of (1, TB) lane-dense rows.
    h = [x_ref[pl.ds(i, 1), :] for i in range(d_in)]

    off = 0
    for li, (din, dout) in enumerate(dims):
        new_h = []
        for j in range(dout):
            # VPU FMA chain: acc = sum_i w[i, j] * h[i] + b[j]
            acc = h[0] * p_ref[off + j]  # w[0, j]
            for i in range(1, din):
                acc = acc + h[i] * p_ref[off + i * dout + j]
            acc = acc + p_ref[off + din * dout + j]  # bias[j]
            if li < n_layers - 1:
                acc = jnp.tanh(acc)  # EUP
            new_h.append(acc)
        h = new_h
        off += din * dout + dout

    for j in range(dims[-1][1]):
        o_ref[pl.ds(j, 1), :] = h[j]


def pack_params(params):
    """Flatten all weights (stored (in, out), row-major) and biases into one f32 vector."""
    flats = []
    for i in range(1, 6):
        flats.append(params[f"w{i}"].reshape(-1))
        flats.append(params[f"b{i}"].reshape(-1))
    return jnp.concatenate(flats).astype(jnp.float32)


def l4_tanh_lr_forward(x, params):
    """x: (B, in_features) float32. params: dict of w1..w5 (in,out) and b1..b5 (1,out)."""
    B, in_features = x.shape
    hidden_dim = params["w1"].shape[1]
    out_features = params["w5"].shape[1]
    dims = [(in_features, hidden_dim)] + [(hidden_dim, hidden_dim)] * 3 + \
           [(hidden_dim, out_features)]

    packed = pack_params(params)

    # Lane-dense batch tiling: TB is a multiple of 128, capped at 2048.
    TB = min(2048, _round_up(B, 128))
    B_pad = _round_up(B, TB)
    n_tiles = B_pad // TB

    # Present batch on the last (lane) axis to the kernel; pad to the tile multiple.
    xt = jnp.transpose(x).astype(jnp.float32)       # (in_features, B)
    if B_pad != B:
        xt = jnp.pad(xt, ((0, 0), (0, B_pad - B)))

    kernel = functools.partial(_mlp_kernel, dims=dims)

    out_t = pl.pallas_call(
        kernel,
        out_shape=jax.ShapeDtypeStruct((out_features, B_pad), jnp.float32),
        grid=(n_tiles,),
        in_specs=[
            # Packed weights/biases: one tiny operand, SMEM-resident for all tiles.
            pl.BlockSpec(memory_space=pltpu.MemorySpace.SMEM),
            # x tile: full feature dim, lane-dense batch tile.
            pl.BlockSpec((in_features, TB), lambda i: (0, i)),
        ],
        out_specs=pl.BlockSpec((out_features, TB), lambda i: (0, i)),
        compiler_params=pltpu.CompilerParams(
            dimension_semantics=("parallel",),   # batch tiles are independent (v7x: 2 TCs)
        ),
    )(packed, xt)

    return jnp.transpose(out_t[:, :B])               # back to (B, out_features)


def init_params(key, in_features=2, hidden_dim=4, out_features=1):
    """Deterministic PyTorch-style init: U(-1/sqrt(fan_in), 1/sqrt(fan_in))."""
    dims = [(in_features, hidden_dim),
            (hidden_dim, hidden_dim),
            (hidden_dim, hidden_dim),
            (hidden_dim, hidden_dim),
            (hidden_dim, out_features)]
    params = {}
    for i, (fan_in, fan_out) in enumerate(dims, start=1):
        key, kw, kb = jax.random.split(key, 3)
        bound = 1.0 / (fan_in ** 0.5)
        params[f"w{i}"] = jax.random.uniform(
            kw, (fan_in, fan_out), jnp.float32, minval=-bound, maxval=bound)
        params[f"b{i}"] = jax.random.uniform(
            kb, (1, fan_out), jnp.float32, minval=-bound, maxval=bound)
    return params


def _reference(x, params):
    h = x
    for i in range(1, 5):
        h = jnp.tanh(h @ params[f"w{i}"] + params[f"b{i}"])
    return h @ params["w5"] + params["b5"]


if __name__ == "__main__":
    key = jax.random.PRNGKey(0)
    kx, kp, kx2 = jax.random.split(key, 3)

    in_features, hidden_dim, out_features = 2, 4, 1
    batch = 8

    params = init_params(kp, in_features, hidden_dim, out_features)

    # Small-shape check (single padded tile).
    x = jax.random.normal(kx, (batch, in_features), jnp.float32)
    out = jax.block_until_ready(l4_tanh_lr_forward(x, params))
    ref = _reference(x, params)
    assert out.shape == (batch, out_features)
    assert jnp.allclose(out, ref, atol=1e-5, rtol=1e-5), "mismatch vs reference (small batch)"

    # Multi-tile / padding check (exercises the batch grid path).
    x2 = jax.random.normal(kx2, (2500, in_features), jnp.float32)
    out2 = jax.block_until_ready(l4_tanh_lr_forward(x2, params))
    ref2 = _reference(x2, params)
    assert out2.shape == (2500, out_features)
    assert jnp.allclose(out2, ref2, atol=1e-5, rtol=1e-5), "mismatch vs reference (large batch)"

    print("KERNEL_OK")
</pallas_src>

<mosaic_0001>
module attributes {stable_mosaic.version = 11 : i64} {
  func.func @_mlp_kernel(%arg0: i32, %arg1: memref<77xf32, #tpu.memory_space<smem>>, %arg2: memref<2x128xf32, #tpu.memory_space<vmem>>, %arg3: memref<1x128xf32, #tpu.memory_space<vmem>>) attributes {dimension_semantics = [#tpu.dimension_semantics<parallel>], iteration_bounds = array<i64: 1>, scalar_prefetch = 0 : i64, scratch_operands = 0 : i64, tpu.core_type = #tpu.core_type<tc>, window_params = [{transform_indices = @transform_0, window_bounds = array<i64: 77>}, {transform_indices = @transform_1, window_bounds = array<i64: 2, 128>}, {transform_indices = @transform_2, window_bounds = array<i64: 1, 128>}]} {
    %c0 = arith.constant 0 : index
    %c0_0 = arith.constant 0 : index
    %0 = vector.load %arg2[%c0, %c0_0] : memref<2x128xf32, #tpu.memory_space<vmem>>, vector<1x128xf32>
    %c1 = arith.constant 1 : index
    %c0_1 = arith.constant 0 : index
    %1 = vector.load %arg2[%c1, %c0_1] : memref<2x128xf32, #tpu.memory_space<vmem>>, vector<1x128xf32>
    %c0_2 = arith.constant 0 : index
    %2 = memref.load %arg1[%c0_2] : memref<77xf32, #tpu.memory_space<smem>>
    %3 = vector.broadcast %2 : f32 to vector<1x128xf32>
    %4 = arith.mulf %0, %3 : vector<1x128xf32>
    %c4 = arith.constant 4 : index
    %5 = memref.load %arg1[%c4] : memref<77xf32, #tpu.memory_space<smem>>
    %6 = vector.broadcast %5 : f32 to vector<1x128xf32>
    %7 = arith.mulf %1, %6 : vector<1x128xf32>
    %8 = arith.addf %4, %7 : vector<1x128xf32>
    %c8 = arith.constant 8 : index
    %9 = memref.load %arg1[%c8] : memref<77xf32, #tpu.memory_space<smem>>
    %10 = vector.broadcast %9 : f32 to vector<1x128xf32>
    %11 = arith.addf %8, %10 : vector<1x128xf32>
    %12 = math.tanh %11 : vector<1x128xf32>
    %c1_3 = arith.constant 1 : index
    %13 = memref.load %arg1[%c1_3] : memref<77xf32, #tpu.memory_space<smem>>
    %14 = vector.broadcast %13 : f32 to vector<1x128xf32>
    %15 = arith.mulf %0, %14 : vector<1x128xf32>
    %c5 = arith.constant 5 : index
    %16 = memref.load %arg1[%c5] : memref<77xf32, #tpu.memory_space<smem>>
    %17 = vector.broadcast %16 : f32 to vector<1x128xf32>
    %18 = arith.mulf %1, %17 : vector<1x128xf32>
    %19 = arith.addf %15, %18 : vector<1x128xf32>
    %c9 = arith.constant 9 : index
    %20 = memref.load %arg1[%c9] : memref<77xf32, #tpu.memory_space<smem>>
    %21 = vector.broadcast %20 : f32 to vector<1x128xf32>
    %22 = arith.addf %19, %21 : vector<1x128xf32>
    %23 = math.tanh %22 : vector<1x128xf32>
    %c2 = arith.constant 2 : index
    %24 = memref.load %arg1[%c2] : memref<77xf32, #tpu.memory_space<smem>>
    %25 = vector.broadcast %24 : f32 to vector<1x128xf32>
    %26 = arith.mulf %0, %25 : vector<1x128xf32>
    %c6 = arith.constant 6 : index
    %27 = memref.load %arg1[%c6] : memref<77xf32, #tpu.memory_space<smem>>
    %28 = vector.broadcast %27 : f32 to vector<1x128xf32>
    %29 = arith.mulf %1, %28 : vector<1x128xf32>
    %30 = arith.addf %26, %29 : vector<1x128xf32>
    %c10 = arith.constant 10 : index
    %31 = memref.load %arg1[%c10] : memref<77xf32, #tpu.memory_space<smem>>
    %32 = vector.broadcast %31 : f32 to vector<1x128xf32>
    %33 = arith.addf %30, %32 : vector<1x128xf32>
    %34 = math.tanh %33 : vector<1x128xf32>
    %c3 = arith.constant 3 : index
    %35 = memref.load %arg1[%c3] : memref<77xf32, #tpu.memory_space<smem>>
    %36 = vector.broadcast %35 : f32 to vector<1x128xf32>
    %37 = arith.mulf %0, %36 : vector<1x128xf32>
    %c7 = arith.constant 7 : index
    %38 = memref.load %arg1[%c7] : memref<77xf32, #tpu.memory_space<smem>>
    %39 = vector.broadcast %38 : f32 to vector<1x128xf32>
    %40 = arith.mulf %1, %39 : vector<1x128xf32>
    %41 = arith.addf %37, %40 : vector<1x128xf32>
    %c11 = arith.constant 11 : index
    %42 = memref.load %arg1[%c11] : memref<77xf32, #tpu.memory_space<smem>>
    %43 = vector.broadcast %42 : f32 to vector<1x128xf32>
    %44 = arith.addf %41, %43 : vector<1x128xf32>
    %45 = math.tanh %44 : vector<1x128xf32>
    %c12 = arith.constant 12 : index
    %46 = memref.load %arg1[%c12] : memref<77xf32, #tpu.memory_space<smem>>
    %47 = vector.broadcast %46 : f32 to vector<1x128xf32>
    %48 = arith.mulf %12, %47 : vector<1x128xf32>
    %c16 = arith.constant 16 : index
    %49 = memref.load %arg1[%c16] : memref<77xf32, #tpu.memory_space<smem>>
    %50 = vector.broadcast %49 : f32 to vector<1x128xf32>
    %51 = arith.mulf %23, %50 : vector<1x128xf32>
    %52 = arith.addf %48, %51 : vector<1x128xf32>
    %c20 = arith.constant 20 : index
    %53 = memref.load %arg1[%c20] : memref<77xf32, #tpu.memory_space<smem>>
    %54 = vector.broadcast %53 : f32 to vector<1x128xf32>
    %55 = arith.mulf %34, %54 : vector<1x128xf32>
    %56 = arith.addf %52, %55 : vector<1x128xf32>
    %c24 = arith.constant 24 : index
    %57 = memref.load %arg1[%c24] : memref<77xf32, #tpu.memory_space<smem>>
    %58 = vector.broadcast %57 : f32 to vector<1x128xf32>
    %59 = arith.mulf %45, %58 : vector<1x128xf32>
    %60 = arith.addf %56, %59 : vector<1x128xf32>
    %c28 = arith.constant 28 : index
    %61 = memref.load %arg1[%c28] : memref<77xf32, #tpu.memory_space<smem>>
    %62 = vector.broadcast %61 : f32 to vector<1x128xf32>
    %63 = arith.addf %60, %62 : vector<1x128xf32>
    %64 = math.tanh %63 : vector<1x128xf32>
    %c13 = arith.constant 13 : index
    %65 = memref.load %arg1[%c13] : memref<77xf32, #tpu.memory_space<smem>>
    %66 = vector.broadcast %65 : f32 to vector<1x128xf32>
    %67 = arith.mulf %12, %66 : vector<1x128xf32>
    %c17 = arith.constant 17 : index
    %68 = memref.load %arg1[%c17] : memref<77xf32, #tpu.memory_space<smem>>
    %69 = vector.broadcast %68 : f32 to vector<1x128xf32>
    %70 = arith.mulf %23, %69 : vector<1x128xf32>
    %71 = arith.addf %67, %70 : vector<1x128xf32>
    %c21 = arith.constant 21 : index
    %72 = memref.load %arg1[%c21] : memref<77xf32, #tpu.memory_space<smem>>
    %73 = vector.broadcast %72 : f32 to vector<1x128xf32>
    %74 = arith.mulf %34, %73 : vector<1x128xf32>
    %75 = arith.addf %71, %74 : vector<1x128xf32>
    %c25 = arith.constant 25 : index
    %76 = memref.load %arg1[%c25] : memref<77xf32, #tpu.memory_space<smem>>
    %77 = vector.broadcast %76 : f32 to vector<1x128xf32>
    %78 = arith.mulf %45, %77 : vector<1x128xf32>
    %79 = arith.addf %75, %78 : vector<1x128xf32>
    %c29 = arith.constant 29 : index
    %80 = memref.load %arg1[%c29] : memref<77xf32, #tpu.memory_space<smem>>
    %81 = vector.broadcast %80 : f32 to vector<1x128xf32>
    %82 = arith.addf %79, %81 : vector<1x128xf32>
    %83 = math.tanh %82 : vector<1x128xf32>
    %c14 = arith.constant 14 : index
    %84 = memref.load %arg1[%c14] : memref<77xf32, #tpu.memory_space<smem>>
    %85 = vector.broadcast %84 : f32 to vector<1x128xf32>
    %86 = arith.mulf %12, %85 : vector<1x128xf32>
    %c18 = arith.constant 18 : index
    %87 = memref.load %arg1[%c18] : memref<77xf32, #tpu.memory_space<smem>>
    %88 = vector.broadcast %87 : f32 to vector<1x128xf32>
    %89 = arith.mulf %23, %88 : vector<1x128xf32>
    %90 = arith.addf %86, %89 : vector<1x128xf32>
    %c22 = arith.constant 22 : index
    %91 = memref.load %arg1[%c22] : memref<77xf32, #tpu.memory_space<smem>>
    %92 = vector.broadcast %91 : f32 to vector<1x128xf32>
    %93 = arith.mulf %34, %92 : vector<1x128xf32>
    %94 = arith.addf %90, %93 : vector<1x128xf32>
    %c26 = arith.constant 26 : index
    %95 = memref.load %arg1[%c26] : memref<77xf32, #tpu.memory_space<smem>>
    %96 = vector.broadcast %95 : f32 to vector<1x128xf32>
    %97 = arith.mulf %45, %96 : vector<1x128xf32>
    %98 = arith.addf %94, %97 : vector<1x128xf32>
    %c30 = arith.constant 30 : index
    %99 = memref.load %arg1[%c30] : memref<77xf32, #tpu.memory_space<smem>>
    %100 = vector.broadcast %99 : f32 to vector<1x128xf32>
    %101 = arith.addf %98, %100 : vector<1x128xf32>
    %102 = math.tanh %101 : vector<1x128xf32>
    %c15 = arith.constant 15 : index
    %103 = memref.load %arg1[%c15] : memref<77xf32, #tpu.memory_space<smem>>
    %104 = vector.broadcast %103 : f32 to vector<1x128xf32>
    %105 = arith.mulf %12, %104 : vector<1x128xf32>
    %c19 = arith.constant 19 : index
    %106 = memref.load %arg1[%c19] : memref<77xf32, #tpu.memory_space<smem>>
    %107 = vector.broadcast %106 : f32 to vector<1x128xf32>
    %108 = arith.mulf %23, %107 : vector<1x128xf32>
    %109 = arith.addf %105, %108 : vector<1x128xf32>
    %c23 = arith.constant 23 : index
    %110 = memref.load %arg1[%c23] : memref<77xf32, #tpu.memory_space<smem>>
    %111 = vector.broadcast %110 : f32 to vector<1x128xf32>
    %112 = arith.mulf %34, %111 : vector<1x128xf32>
    %113 = arith.addf %109, %112 : vector<1x128xf32>
    %c27 = arith.constant 27 : index
    %114 = memref.load %arg1[%c27] : memref<77xf32, #tpu.memory_space<smem>>
    %115 = vector.broadcast %114 : f32 to vector<1x128xf32>
    %116 = arith.mulf %45, %115 : vector<1x128xf32>
    %117 = arith.addf %113, %116 : vector<1x128xf32>
    %c31 = arith.constant 31 : index
    %118 = memref.load %arg1[%c31] : memref<77xf32, #tpu.memory_space<smem>>
    %119 = vector.broadcast %118 : f32 to vector<1x128xf32>
    %120 = arith.addf %117, %119 : vector<1x128xf32>
    %121 = math.tanh %120 : vector<1x128xf32>
    %c32 = arith.constant 32 : index
    %122 = memref.load %arg1[%c32] : memref<77xf32, #tpu.memory_space<smem>>
    %123 = vector.broadcast %122 : f32 to vector<1x128xf32>
    %124 = arith.mulf %64, %123 : vector<1x128xf32>
    %c36 = arith.constant 36 : index
    %125 = memref.load %arg1[%c36] : memref<77xf32, #tpu.memory_space<smem>>
    %126 = vector.broadcast %125 : f32 to vector<1x128xf32>
    %127 = arith.mulf %83, %126 : vector<1x128xf32>
    %128 = arith.addf %124, %127 : vector<1x128xf32>
    %c40 = arith.constant 40 : index
    %129 = memref.load %arg1[%c40] : memref<77xf32, #tpu.memory_space<smem>>
    %130 = vector.broadcast %129 : f32 to vector<1x128xf32>
    %131 = arith.mulf %102, %130 : vector<1x128xf32>
    %132 = arith.addf %128, %131 : vector<1x128xf32>
    %c44 = arith.constant 44 : index
    %133 = memref.load %arg1[%c44] : memref<77xf32, #tpu.memory_space<smem>>
    %134 = vector.broadcast %133 : f32 to vector<1x128xf32>
    %135 = arith.mulf %121, %134 : vector<1x128xf32>
    %136 = arith.addf %132, %135 : vector<1x128xf32>
    %c48 = arith.constant 48 : index
    %137 = memref.load %arg1[%c48] : memref<77xf32, #tpu.memory_space<smem>>
    %138 = vector.broadcast %137 : f32 to vector<1x128xf32>
    %139 = arith.addf %136, %138 : vector<1x128xf32>
    %140 = math.tanh %139 : vector<1x128xf32>
    %c33 = arith.constant 33 : index
    %141 = memref.load %arg1[%c33] : memref<77xf32, #tpu.memory_space<smem>>
    %142 = vector.broadcast %141 : f32 to vector<1x128xf32>
    %143 = arith.mulf %64, %142 : vector<1x128xf32>
    %c37 = arith.constant 37 : index
    %144 = memref.load %arg1[%c37] : memref<77xf32, #tpu.memory_space<smem>>
    %145 = vector.broadcast %144 : f32 to vector<1x128xf32>
    %146 = arith.mulf %83, %145 : vector<1x128xf32>
    %147 = arith.addf %143, %146 : vector<1x128xf32>
    %c41 = arith.constant 41 : index
    %148 = memref.load %arg1[%c41] : memref<77xf32, #tpu.memory_space<smem>>
    %149 = vector.broadcast %148 : f32 to vector<1x128xf32>
    %150 = arith.mulf %102, %149 : vector<1x128xf32>
    %151 = arith.addf %147, %150 : vector<1x128xf32>
    %c45 = arith.constant 45 : index
    %152 = memref.load %arg1[%c45] : memref<77xf32, #tpu.memory_space<smem>>
    %153 = vector.broadcast %152 : f32 to vector<1x128xf32>
    %154 = arith.mulf %121, %153 : vector<1x128xf32>
    %155 = arith.addf %151, %154 : vector<1x128xf32>
    %c49 = arith.constant 49 : index
    %156 = memref.load %arg1[%c49] : memref<77xf32, #tpu.memory_space<smem>>
    %157 = vector.broadcast %156 : f32 to vector<1x128xf32>
    %158 = arith.addf %155, %157 : vector<1x128xf32>
    %159 = math.tanh %158 : vector<1x128xf32>
    %c34 = arith.constant 34 : index
    %160 = memref.load %arg1[%c34] : memref<77xf32, #tpu.memory_space<smem>>
    %161 = vector.broadcast %160 : f32 to vector<1x128xf32>
    %162 = arith.mulf %64, %161 : vector<1x128xf32>
    %c38 = arith.constant 38 : index
    %163 = memref.load %arg1[%c38] : memref<77xf32, #tpu.memory_space<smem>>
    %164 = vector.broadcast %163 : f32 to vector<1x128xf32>
    %165 = arith.mulf %83, %164 : vector<1x128xf32>
    %166 = arith.addf %162, %165 : vector<1x128xf32>
    %c42 = arith.constant 42 : index
    %167 = memref.load %arg1[%c42] : memref<77xf32, #tpu.memory_space<smem>>
    %168 = vector.broadcast %167 : f32 to vector<1x128xf32>
    %169 = arith.mulf %102, %168 : vector<1x128xf32>
    %170 = arith.addf %166, %169 : vector<1x128xf32>
    %c46 = arith.constant 46 : index
    %171 = memref.load %arg1[%c46] : memref<77xf32, #tpu.memory_space<smem>>
    %172 = vector.broadcast %171 : f32 to vector<1x128xf32>
    %173 = arith.mulf %121, %172 : vector<1x128xf32>
    %174 = arith.addf %170, %173 : vector<1x128xf32>
    %c50 = arith.constant 50 : index
    %175 = memref.load %arg1[%c50] : memref<77xf32, #tpu.memory_space<smem>>
    %176 = vector.broadcast %175 : f32 to vector<1x128xf32>
    %177 = arith.addf %174, %176 : vector<1x128xf32>
    %178 = math.tanh %177 : vector<1x128xf32>
    %c35 = arith.constant 35 : index
    %179 = memref.load %arg1[%c35] : memref<77xf32, #tpu.memory_space<smem>>
    %180 = vector.broadcast %179 : f32 to vector<1x128xf32>
    %181 = arith.mulf %64, %180 : vector<1x128xf32>
    %c39 = arith.constant 39 : index
    %182 = memref.load %arg1[%c39] : memref<77xf32, #tpu.memory_space<smem>>
    %183 = vector.broadcast %182 : f32 to vector<1x128xf32>
    %184 = arith.mulf %83, %183 : vector<1x128xf32>
    %185 = arith.addf %181, %184 : vector<1x128xf32>
    %c43 = arith.constant 43 : index
    %186 = memref.load %arg1[%c43] : memref<77xf32, #tpu.memory_space<smem>>
    %187 = vector.broadcast %186 : f32 to vector<1x128xf32>
    %188 = arith.mulf %102, %187 : vector<1x128xf32>
    %189 = arith.addf %185, %188 : vector<1x128xf32>
    %c47 = arith.constant 47 : index
    %190 = memref.load %arg1[%c47] : memref<77xf32, #tpu.memory_space<smem>>
    %191 = vector.broadcast %190 : f32 to vector<1x128xf32>
    %192 = arith.mulf %121, %191 : vector<1x128xf32>
    %193 = arith.addf %189, %192 : vector<1x128xf32>
    %c51 = arith.constant 51 : index
    %194 = memref.load %arg1[%c51] : memref<77xf32, #tpu.memory_space<smem>>
    %195 = vector.broadcast %194 : f32 to vector<1x128xf32>
    %196 = arith.addf %193, %195 : vector<1x128xf32>
    %197 = math.tanh %196 : vector<1x128xf32>
    %c52 = arith.constant 52 : index
    %198 = memref.load %arg1[%c52] : memref<77xf32, #tpu.memory_space<smem>>
    %199 = vector.broadcast %198 : f32 to vector<1x128xf32>
    %200 = arith.mulf %140, %199 : vector<1x128xf32>
    %c56 = arith.constant 56 : index
    %201 = memref.load %arg1[%c56] : memref<77xf32, #tpu.memory_space<smem>>
    %202 = vector.broadcast %201 : f32 to vector<1x128xf32>
    %203 = arith.mulf %159, %202 : vector<1x128xf32>
    %204 = arith.addf %200, %203 : vector<1x128xf32>
    %c60 = arith.constant 60 : index
    %205 = memref.load %arg1[%c60] : memref<77xf32, #tpu.memory_space<smem>>
    %206 = vector.broadcast %205 : f32 to vector<1x128xf32>
    %207 = arith.mulf %178, %206 : vector<1x128xf32>
    %208 = arith.addf %204, %207 : vector<1x128xf32>
    %c64 = arith.constant 64 : index
    %209 = memref.load %arg1[%c64] : memref<77xf32, #tpu.memory_space<smem>>
    %210 = vector.broadcast %209 : f32 to vector<1x128xf32>
    %211 = arith.mulf %197, %210 : vector<1x128xf32>
    %212 = arith.addf %208, %211 : vector<1x128xf32>
    %c68 = arith.constant 68 : index
    %213 = memref.load %arg1[%c68] : memref<77xf32, #tpu.memory_space<smem>>
    %214 = vector.broadcast %213 : f32 to vector<1x128xf32>
    %215 = arith.addf %212, %214 : vector<1x128xf32>
    %216 = math.tanh %215 : vector<1x128xf32>
    %c53 = arith.constant 53 : index
    %217 = memref.load %arg1[%c53] : memref<77xf32, #tpu.memory_space<smem>>
    %218 = vector.broadcast %217 : f32 to vector<1x128xf32>
    %219 = arith.mulf %140, %218 : vector<1x128xf32>
    %c57 = arith.constant 57 : index
    %220 = memref.load %arg1[%c57] : memref<77xf32, #tpu.memory_space<smem>>
    %221 = vector.broadcast %220 : f32 to vector<1x128xf32>
    %222 = arith.mulf %159, %221 : vector<1x128xf32>
    %223 = arith.addf %219, %222 : vector<1x128xf32>
    %c61 = arith.constant 61 : index
    %224 = memref.load %arg1[%c61] : memref<77xf32, #tpu.memory_space<smem>>
    %225 = vector.broadcast %224 : f32 to vector<1x128xf32>
    %226 = arith.mulf %178, %225 : vector<1x128xf32>
    %227 = arith.addf %223, %226 : vector<1x128xf32>
    %c65 = arith.constant 65 : index
    %228 = memref.load %arg1[%c65] : memref<77xf32, #tpu.memory_space<smem>>
    %229 = vector.broadcast %228 : f32 to vector<1x128xf32>
    %230 = arith.mulf %197, %229 : vector<1x128xf32>
    %231 = arith.addf %227, %230 : vector<1x128xf32>
    %c69 = arith.constant 69 : index
    %232 = memref.load %arg1[%c69] : memref<77xf32, #tpu.memory_space<smem>>
    %233 = vector.broadcast %232 : f32 to vector<1x128xf32>
    %234 = arith.addf %231, %233 : vector<1x128xf32>
    %235 = math.tanh %234 : vector<1x128xf32>
    %c54 = arith.constant 54 : index
    %236 = memref.load %arg1[%c54] : memref<77xf32, #tpu.memory_space<smem>>
    %237 = vector.broadcast %236 : f32 to vector<1x128xf32>
    %238 = arith.mulf %140, %237 : vector<1x128xf32>
    %c58 = arith.constant 58 : index
    %239 = memref.load %arg1[%c58] : memref<77xf32, #tpu.memory_space<smem>>
    %240 = vector.broadcast %239 : f32 to vector<1x128xf32>
    %241 = arith.mulf %159, %240 : vector<1x128xf32>
    %242 = arith.addf %238, %241 : vector<1x128xf32>
    %c62 = arith.constant 62 : index
    %243 = memref.load %arg1[%c62] : memref<77xf32, #tpu.memory_space<smem>>
    %244 = vector.broadcast %243 : f32 to vector<1x128xf32>
    %245 = arith.mulf %178, %244 : vector<1x128xf32>
    %246 = arith.addf %242, %245 : vector<1x128xf32>
    %c66 = arith.constant 66 : index
    %247 = memref.load %arg1[%c66] : memref<77xf32, #tpu.memory_space<smem>>
    %248 = vector.broadcast %247 : f32 to vector<1x128xf32>
    %249 = arith.mulf %197, %248 : vector<1x128xf32>
    %250 = arith.addf %246, %249 : vector<1x128xf32>
    %c70 = arith.constant 70 : index
    %251 = memref.load %arg1[%c70] : memref<77xf32, #tpu.memory_space<smem>>
    %252 = vector.broadcast %251 : f32 to vector<1x128xf32>
    %253 = arith.addf %250, %252 : vector<1x128xf32>
    %254 = math.tanh %253 : vector<1x128xf32>
    %c55 = arith.constant 55 : index
    %255 = memref.load %arg1[%c55] : memref<77xf32, #tpu.memory_space<smem>>
    %256 = vector.broadcast %255 : f32 to vector<1x128xf32>
    %257 = arith.mulf %140, %256 : vector<1x128xf32>
    %c59 = arith.constant 59 : index
    %258 = memref.load %arg1[%c59] : memref<77xf32, #tpu.memory_space<smem>>
    %259 = vector.broadcast %258 : f32 to vector<1x128xf32>
    %260 = arith.mulf %159, %259 : vector<1x128xf32>
    %261 = arith.addf %257, %260 : vector<1x128xf32>
    %c63 = arith.constant 63 : index
    %262 = memref.load %arg1[%c63] : memref<77xf32, #tpu.memory_space<smem>>
    %263 = vector.broadcast %262 : f32 to vector<1x128xf32>
    %264 = arith.mulf %178, %263 : vector<1x128xf32>
    %265 = arith.addf %261, %264 : vector<1x128xf32>
    %c67 = arith.constant 67 : index
    %266 = memref.load %arg1[%c67] : memref<77xf32, #tpu.memory_space<smem>>
    %267 = vector.broadcast %266 : f32 to vector<1x128xf32>
    %268 = arith.mulf %197, %267 : vector<1x128xf32>
    %269 = arith.addf %265, %268 : vector<1x128xf32>
    %c71 = arith.constant 71 : index
    %270 = memref.load %arg1[%c71] : memref<77xf32, #tpu.memory_space<smem>>
    %271 = vector.broadcast %270 : f32 to vector<1x128xf32>
    %272 = arith.addf %269, %271 : vector<1x128xf32>
    %273 = math.tanh %272 : vector<1x128xf32>
    %c72 = arith.constant 72 : index
    %274 = memref.load %arg1[%c72] : memref<77xf32, #tpu.memory_space<smem>>
    %275 = vector.broadcast %274 : f32 to vector<1x128xf32>
    %276 = arith.mulf %216, %275 : vector<1x128xf32>
    %c73 = arith.constant 73 : index
    %277 = memref.load %arg1[%c73] : memref<77xf32, #tpu.memory_space<smem>>
    %278 = vector.broadcast %277 : f32 to vector<1x128xf32>
    %279 = arith.mulf %235, %278 : vector<1x128xf32>
    %280 = arith.addf %276, %279 : vector<1x128xf32>
    %c74 = arith.constant 74 : index
    %281 = memref.load %arg1[%c74] : memref<77xf32, #tpu.memory_space<smem>>
    %282 = vector.broadcast %281 : f32 to vector<1x128xf32>
    %283 = arith.mulf %254, %282 : vector<1x128xf32>
    %284 = arith.addf %280, %283 : vector<1x128xf32>
    %c75 = arith.constant 75 : index
    %285 = memref.load %arg1[%c75] : memref<77xf32, #tpu.memory_space<smem>>
    %286 = vector.broadcast %285 : f32 to vector<1x128xf32>
    %287 = arith.mulf %273, %286 : vector<1x128xf32>
    %288 = arith.addf %284, %287 : vector<1x128xf32>
    %c76 = arith.constant 76 : index
    %289 = memref.load %arg1[%c76] : memref<77xf32, #tpu.memory_space<smem>>
    %290 = vector.broadcast %289 : f32 to vector<1x128xf32>
    %291 = arith.addf %288, %290 : vector<1x128xf32>
    %c0_4 = arith.constant 0 : index
    %c0_5 = arith.constant 0 : index
    %292 = vector.load %arg3[%c0_4, %c0_5] : memref<1x128xf32, #tpu.memory_space<vmem>>, vector<1x128xf32>
    tpu.vector_store %arg3[%c0_4, %c0_5], %291 {strides = array<i32>} : memref<1x128xf32, #tpu.memory_space<vmem>>, vector<1x128xf32>,
    return
  }
  func.func @transform_0(%arg0: i32) -> i32 {
    %c0_i32 = arith.constant 0 : i32
    %c0_i32_0 = arith.constant 0 : i32
    return %c0_i32 : i32
  }
  func.func @transform_1(%arg0: i32) -> (i32, i32) {
    %c0_i32 = arith.constant 0 : i32
    %c0_i32_0 = arith.constant 0 : i32
    return %c0_i32, %arg0 : i32, i32
  }
  func.func @transform_2(%arg0: i32) -> (i32, i32) {
    %c0_i32 = arith.constant 0 : i32
    %c0_i32_0 = arith.constant 0 : i32
    return %c0_i32, %arg0 : i32, i32
  }
}

</mosaic_0001>

<llo_original>
// kernel: tpu_custom_call.1
$region0: #{tpu_custom_call.1}
  #allocation0 [shape = 'u32[]', space=smem, size = 0x4, offset = 0x4, fixed_abs, tag = 'smem constant byte address 0x4 - core index']
  #allocation1 [shape = 'u32[144,128]{1,0:T(1,128)}', space=vmem, size = 0x12000, scoped, tag = 'internal scratch']
  %s0 = inlined_call_operand.hbm [shape: f32[77], index: 0, kind: input, shape index: {}]
  %s1 = inlined_call_operand.vmem [shape: f32[2,128], index: 1, kind: input, shape index: {}]
  %s2 = inlined_call_operand.hbm [shape: f32[1,128], index: 2, kind: output, shape index: {}]
  %s3 = sld [smem:[#allocation0]]
  $region22: #{tpu_custom_call.1} parent=0
    _
  %s5 = ssub.s32 1, %s3
  %s6 = scalar_select 0, %s5, %s3
  $region1: #{tpu_custom_call.1} parent=0
    #allocation2 [shape = 'u8[512]{0}', space=smem, size = 0x200, scoped, tag = 'input window, operand 0, single buffered']
    #allocation3 [shape = 's32[1]{0}', space=sflag, size = 0x4, scoped, tag = 'scoped memory for tpu_custom_call.1']
    #allocation4 [shape = 's32[1]{0}', space=sflag, size = 0x4, scoped, tag = 'scoped memory for tpu_custom_call.1']
    #allocation5 [shape = 'u8[512]{0}', space=vmem, size = 0x400, scoped, tag = 'output window, operand 0, single buffered']
    %7 = vsyncpa [#allocation4], 0
    %8 = vsyncpa [#allocation3], 0
    // Predicated region
    $region2: #{tpu_custom_call.1} parent=1 // pred_check
      _
    $region3: #{tpu_custom_call.1} parent=1 // pred_check_branch
      %10 = sbr.rel (0) target = $region5
    $region4: #{tpu_custom_call.1} parent=1 // pred_region
      %s12 = ssub.s32 16, 16
      %13 = vsyncadd [#allocation4], %s12
      %16 = dma.hbm_to_smem %s0, 16, [#allocation2], [#allocation4]
    $region5: #{tpu_custom_call.1} parent=1 // pred_fallthru
      _
    // Predicated region
    $region6: #{tpu_custom_call.1} parent=1 // pred_check
      _
    $region7: #{tpu_custom_call.1} parent=1 // pred_check_branch
      %18 = sbr.rel (0) target = $region9
    $region8: #{tpu_custom_call.1} parent=1 // pred_region
      _
    $region9: #{tpu_custom_call.1} parent=1 // pred_fallthru
      _
    // Predicated region
    $region10: #{tpu_custom_call.1} parent=1 // pred_check
      _
    $region11: #{tpu_custom_call.1} parent=1 // pred_check_branch
      %20 = sbr.rel (0) target = $region13
    $region12: #{tpu_custom_call.1} parent=1 // pred_region
      %21 = dma.done [#allocation4], 16
    $region13: #{tpu_custom_call.1} parent=1 // pred_fallthru
      _
    %22 = sfence
    %v23 = vld [vmem:[%s1] sm:$0x1]
    %v24 = vld [vmem:[%s1 + $0x1] sm:$0x1]
    %s25 = sld [smem:[#allocation2]]
    %v26 = vstv %s25
    %v27 = vmul.f32 %v23, %v26
    %s28 = sld [smem:[#allocation2 + $0x4]]
    %v29 = vstv %s28
    %v30 = vmul.f32 %v24, %v29
    %v31 = vadd.f32 %v27, %v30
    %s32 = sld [smem:[#allocation2 + $0x8]]
    %v33 = vstv %s32
    %v34 = vadd.f32 %v31, %v33
    %v35 = vtanh.pop %v34
    %s36 = sld [smem:[#allocation2 + $0x1]]
    %v37 = vstv %s36
    %v38 = vmul.f32 %v23, %v37
    %s39 = sld [smem:[#allocation2 + $0x5]]
    %v40 = vstv %s39
    %v41 = vmul.f32 %v24, %v40
    %v42 = vadd.f32 %v38, %v41
    %s43 = sld [smem:[#allocation2 + $0x9]]
    %v44 = vstv %s43
    %v45 = vadd.f32 %v42, %v44
    %v46 = vtanh.pop %v45
    %s47 = sld [smem:[#allocation2 + $0x2]]
    %v48 = vstv %s47
    %v49 = vmul.f32 %v23, %v48
    %s50 = sld [smem:[#allocation2 + $0x6]]
    %v51 = vstv %s50
    %v52 = vmul.f32 %v24, %v51
    %v53 = vadd.f32 %v49, %v52
    %s54 = sld [smem:[#allocation2 + $0xa]]
    %v55 = vstv %s54
    %v56 = vadd.f32 %v53, %v55
    %v57 = vtanh.pop %v56
    %s58 = sld [smem:[#allocation2 + $0x3]]
    %v59 = vstv %s58
    %v60 = vmul.f32 %v23, %v59
    %s61 = sld [smem:[#allocation2 + $0x7]]
    %v62 = vstv %s61
    %v63 = vmul.f32 %v24, %v62
    %v64 = vadd.f32 %v60, %v63
    %s65 = sld [smem:[#allocation2 + $0xb]]
    %v66 = vstv %s65
    %v67 = vadd.f32 %v64, %v66
    %v68 = vtanh.pop %v67
    %s69 = sld [smem:[#allocation2 + $0xc]]
    %v70 = vstv %s69
    %v71 = vmul.f32 %v35, %v70
    %s72 = sld [smem:[#allocation2 + $0x10]]
    %v73 = vstv %s72
    %v74 = vmul.f32 %v46, %v73
    %v75 = vadd.f32 %v71, %v74
    %s76 = sld [smem:[#allocation2 + $0x14]]
    %v77 = vstv %s76
    %v78 = vmul.f32 %v57, %v77
    %v79 = vadd.f32 %v75, %v78
    %s80 = sld [smem:[#allocation2 + $0x18]]
    %v81 = vstv %s80
    %v82 = vmul.f32 %v68, %v81
    %v83 = vadd.f32 %v79, %v82
    %s84 = sld [smem:[#allocation2 + $0x1c]]
    %v85 = vstv %s84
    %v86 = vadd.f32 %v83, %v85
    %v87 = vtanh.pop %v86
    %s88 = sld [smem:[#allocation2 + $0xd]]
    %v89 = vstv %s88
    %v90 = vmul.f32 %v35, %v89
    %s91 = sld [smem:[#allocation2 + $0x11]]
    %v92 = vstv %s91
    %v93 = vmul.f32 %v46, %v92
    %v94 = vadd.f32 %v90, %v93
    %s95 = sld [smem:[#allocation2 + $0x15]]
    %v96 = vstv %s95
    %v97 = vmul.f32 %v57, %v96
    %v98 = vadd.f32 %v94, %v97
    %s99 = sld [smem:[#allocation2 + $0x19]]
    %v100 = vstv %s99
    %v101 = vmul.f32 %v68, %v100
    %v102 = vadd.f32 %v98, %v101
    %s103 = sld [smem:[#allocation2 + $0x1d]]
    %v104 = vstv %s103
    %v105 = vadd.f32 %v102, %v104
    %v106 = vtanh.pop %v105
    %s107 = sld [smem:[#allocation2 + $0xe]]
    %v108 = vstv %s107
    %v109 = vmul.f32 %v35, %v108
    %s110 = sld [smem:[#allocation2 + $0x12]]
    %v111 = vstv %s110
    %v112 = vmul.f32 %v46, %v111
    %v113 = vadd.f32 %v109, %v112
    %s114 = sld [smem:[#allocation2 + $0x16]]
    %v115 = vstv %s114
    %v116 = vmul.f32 %v57, %v115
    %v117 = vadd.f32 %v113, %v116
    %s118 = sld [smem:[#allocation2 + $0x1a]]
    %v119 = vstv %s118
    %v120 = vmul.f32 %v68, %v119
    %v121 = vadd.f32 %v117, %v120
    %s122 = sld [smem:[#allocation2 + $0x1e]]
    %v123 = vstv %s122
    %v124 = vadd.f32 %v121, %v123
    %v125 = vtanh.pop %v124
    %s126 = sld [smem:[#allocation2 + $0xf]]
    %v127 = vstv %s126
    %v128 = vmul.f32 %v35, %v127
    %s129 = sld [smem:[#allocation2 + $0x13]]
    %v130 = vstv %s129
    %v131 = vmul.f32 %v46, %v130
    %v132 = vadd.f32 %v128, %v131
    %s133 = sld [smem:[#allocation2 + $0x17]]
    %v134 = vstv %s133
    %v135 = vmul.f32 %v57, %v134
    %v136 = vadd.f32 %v132, %v135
    %s137 = sld [smem:[#allocation2 + $0x1b]]
    %v138 = vstv %s137
    %v139 = vmul.f32 %v68, %v138
    %v140 = vadd.f32 %v136, %v139
    %s141 = sld [smem:[#allocation2 + $0x1f]]
    %v142 = vstv %s141
    %v143 = vadd.f32 %v140, %v142
    %v144 = vtanh.pop %v143
    %s145 = sld [smem:[#allocation2 + $0x20]]
    %v146 = vstv %s145
    %v147 = vmul.f32 %v87, %v146
    %s148 = sld [smem:[#allocation2 + $0x24]]
    %v149 = vstv %s148
    %v150 = vmul.f32 %v106, %v149
    %v151 = vadd.f32 %v147, %v150
    %s152 = sld [smem:[#allocation2 + $0x28]]
    %v153 = vstv %s152
    %v154 = vmul.f32 %v125, %v153
    %v155 = vadd.f32 %v151, %v154
    %s156 = sld [smem:[#allocation2 + $0x2c]]
    %v157 = vstv %s156
    %v158 = vmul.f32 %v144, %v157
    %v159 = vadd.f32 %v155, %v158
    %s160 = sld [smem:[#allocation2 + $0x30]]
    %v161 = vstv %s160
    %v162 = vadd.f32 %v159, %v161
    %v163 = vtanh.pop %v162
    %s164 = sld [smem:[#allocation2 + $0x21]]
    %v165 = vstv %s164
    %v166 = vmul.f32 %v87, %v165
    %s167 = sld [smem:[#allocation2 + $0x25]]
    %v168 = vstv %s167
    %v169 = vmul.f32 %v106, %v168
    %v170 = vadd.f32 %v166, %v169
    %s171 = sld [smem:[#allocation2 + $0x29]]
    %v172 = vstv %s171
    %v173 = vmul.f32 %v125, %v172
    %v174 = vadd.f32 %v170, %v173
    %s175 = sld [smem:[#allocation2 + $0x2d]]
    %v176 = vstv %s175
    %v177 = vmul.f32 %v144, %v176
    %v178 = vadd.f32 %v174, %v177
    %s179 = sld [smem:[#allocation2 + $0x31]]
    %v180 = vstv %s179
    %v181 = vadd.f32 %v178, %v180
    %v182 = vtanh.pop %v181
    %s183 = sld [smem:[#allocation2 + $0x22]]
    %v184 = vstv %s183
    %v185 = vmul.f32 %v87, %v184
    %s186 = sld [smem:[#allocation2 + $0x26]]
    %v187 = vstv %s186
    %v188 = vmul.f32 %v106, %v187
    %v189 = vadd.f32 %v185, %v188
    %s190 = sld [smem:[#allocation2 + $0x2a]]
    %v191 = vstv %s190
    %v192 = vmul.f32 %v125, %v191
    %v193 = vadd.f32 %v189, %v192
    %s194 = sld [smem:[#allocation2 + $0x2e]]
    %v195 = vstv %s194
    %v196 = vmul.f32 %v144, %v195
    %v197 = vadd.f32 %v193, %v196
    %s198 = sld [smem:[#allocation2 + $0x32]]
    %v199 = vstv %s198
    %v200 = vadd.f32 %v197, %v199
    %v201 = vtanh.pop %v200
    %s202 = sld [smem:[#allocation2 + $0x23]]
    %v203 = vstv %s202
    %v204 = vmul.f32 %v87, %v203
    %s205 = sld [smem:[#allocation2 + $0x27]]
    %v206 = vstv %s205
    %v207 = vmul.f32 %v106, %v206
    %v208 = vadd.f32 %v204, %v207
    %s209 = sld [smem:[#allocation2 + $0x2b]]
    %v210 = vstv %s209
    %v211 = vmul.f32 %v125, %v210
    %v212 = vadd.f32 %v208, %v211
    %s213 = sld [smem:[#allocation2 + $0x2f]]
    %v214 = vstv %s213
    %v215 = vmul.f32 %v144, %v214
    %v216 = vadd.f32 %v212, %v215
    %s217 = sld [smem:[#allocation2 + $0x33]]
    %v218 = vstv %s217
    %v219 = vadd.f32 %v216, %v218
    %v220 = vtanh.pop %v219
    %s221 = sld [smem:[#allocation2 + $0x34]]
    %v222 = vstv %s221
    %v223 = vmul.f32 %v163, %v222
    %s224 = sld [smem:[#allocation2 + $0x38]]
    %v225 = vstv %s224
    %v226 = vmul.f32 %v182, %v225
    %v227 = vadd.f32 %v223, %v226
    %s228 = sld [smem:[#allocation2 + $0x3c]]
    %v229 = vstv %s228
    %v230 = vmul.f32 %v201, %v229
    %v231 = vadd.f32 %v227, %v230
    %s232 = sld [smem:[#allocation2 + $0x40]]
    %v233 = vstv %s232
    %v234 = vmul.f32 %v220, %v233
    %v235 = vadd.f32 %v231, %v234
    %s236 = sld [smem:[#allocation2 + $0x44]]
    %v237 = vstv %s236
    %v238 = vadd.f32 %v235, %v237
    %v239 = vtanh.pop %v238
    %s240 = sld [smem:[#allocation2 + $0x35]]
    %v241 = vstv %s240
    %v242 = vmul.f32 %v163, %v241
    %s243 = sld [smem:[#allocation2 + $0x39]]
    %v244 = vstv %s243
    %v245 = vmul.f32 %v182, %v244
    %v246 = vadd.f32 %v242, %v245
    %s247 = sld [smem:[#allocation2 + $0x3d]]
    %v248 = vstv %s247
    %v249 = vmul.f32 %v201, %v248
    %v250 = vadd.f32 %v246, %v249
    %s251 = sld [smem:[#allocation2 + $0x41]]
    %v252 = vstv %s251
    %v253 = vmul.f32 %v220, %v252
    %v254 = vadd.f32 %v250, %v253
    %s255 = sld [smem:[#allocation2 + $0x45]]
    %v256 = vstv %s255
    %v257 = vadd.f32 %v254, %v256
    %v258 = vtanh.pop %v257
    %s259 = sld [smem:[#allocation2 + $0x36]]
    %v260 = vstv %s259
    %v261 = vmul.f32 %v163, %v260
    %s262 = sld [smem:[#allocation2 + $0x3a]]
    %v263 = vstv %s262
    %v264 = vmul.f32 %v182, %v263
    %v265 = vadd.f32 %v261, %v264
    %s266 = sld [smem:[#allocation2 + $0x3e]]
    %v267 = vstv %s266
    %v268 = vmul.f32 %v201, %v267
    %v269 = vadd.f32 %v265, %v268
    %s270 = sld [smem:[#allocation2 + $0x42]]
    %v271 = vstv %s270
    %v272 = vmul.f32 %v220, %v271
    %v273 = vadd.f32 %v269, %v272
    %s274 = sld [smem:[#allocation2 + $0x46]]
    %v275 = vstv %s274
    %v276 = vadd.f32 %v273, %v275
    %v277 = vtanh.pop %v276
    %s278 = sld [smem:[#allocation2 + $0x37]]
    %v279 = vstv %s278
    %v280 = vmul.f32 %v163, %v279
    %s281 = sld [smem:[#allocation2 + $0x3b]]
    %v282 = vstv %s281
    %v283 = vmul.f32 %v182, %v282
    %v284 = vadd.f32 %v280, %v283
    %s285 = sld [smem:[#allocation2 + $0x3f]]
    %v286 = vstv %s285
    %v287 = vmul.f32 %v201, %v286
    %v288 = vadd.f32 %v284, %v287
    %s289 = sld [smem:[#allocation2 + $0x43]]
    %v290 = vstv %s289
    %v291 = vmul.f32 %v220, %v290
    %v292 = vadd.f32 %v288, %v291
    %s293 = sld [smem:[#allocation2 + $0x47]]
    %v294 = vstv %s293
    %v295 = vadd.f32 %v292, %v294
    %v296 = vtanh.pop %v295
    %s297 = sld [smem:[#allocation2 + $0x48]]
    %v298 = vstv %s297
    %v299 = vmul.f32 %v239, %v298
    %s300 = sld [smem:[#allocation2 + $0x49]]
    %v301 = vstv %s300
    %v302 = vmul.f32 %v258, %v301
    %v303 = vadd.f32 %v299, %v302
    %s304 = sld [smem:[#allocation2 + $0x4a]]
    %v305 = vstv %s304
    %v306 = vmul.f32 %v277, %v305
    %v307 = vadd.f32 %v303, %v306
    %s308 = sld [smem:[#allocation2 + $0x4b]]
    %v309 = vstv %s308
    %v310 = vmul.f32 %v296, %v309
    %v311 = vadd.f32 %v307, %v310
    %s312 = sld [smem:[#allocation2 + $0x4c]]
    %v313 = vstv %s312
    %v314 = vadd.f32 %v311, %v313
    %315 = vst [vmem:[#allocation5] sm:$0x1] %v314
    // Predicated region
    $region14: #{tpu_custom_call.1} parent=1 // pred_check
      _
    $region15: #{tpu_custom_call.1} parent=1 // pred_check_branch
      %317 = sbr.rel (0) target = $region17
    $region16: #{tpu_custom_call.1} parent=1 // pred_region
      %s319 = ssub.s32 16, 16
      %320 = vsyncadd [#allocation3], %s319
      %s322 = sshll.u32 [#allocation5], 4
      %s323 = int_to_ptr.vmem [resolvable:$true] %s322
      %325 = dma.vmem_to_hbm [thread:$0]  %s323, 16, %s2, [#allocation3]
    $region17: #{tpu_custom_call.1} parent=1 // pred_fallthru
      _
    // Predicated region
    $region18: #{tpu_custom_call.1} parent=1 // pred_check
      _
    $region19: #{tpu_custom_call.1} parent=1 // pred_check_branch
      %327 = sbr.rel (0) target = $region21
    $region20: #{tpu_custom_call.1} parent=1 // pred_region
      %328 = dma.done [#allocation3], 16
    $region21: #{tpu_custom_call.1} parent=1 // pred_fallthru
      _
    %329 = vsyncpa [#allocation3], 1
    %330 = vsyncpa [#allocation4], 1

</llo_original>
